<compile_context>
chip_gen: v6e
topology: v6e:2x2x1
jax: 0.10.0
libtpu: 0.0.40
codegen_flags: <defaults>
</compile_context>

<pallas_src>
import jax
import jax.numpy as jnp
from jax.experimental import pallas as pl
from jax.experimental.pallas import tpu as pltpu

LANES = 128
NEG_INF = -1e30  # bias for padded output lanes: exp() underflows to exactly 0 in f32


def _round_up(n, m):
    return ((n + m - 1) // m) * m


def reinforce_forward_kernel(x_ref, w1_ref, b1_ref, w2_ref, b2_ref, out_ref):
    # fc1: in-kernel bf16 cast of x (free VALU work), f32 MXU accumulation,
    # bias add + ReLU in f32.
    x = x_ref[...].astype(w1_ref.dtype)
    h = jnp.dot(x, w1_ref[...], preferred_element_type=jnp.float32)
    h = jnp.maximum(h + b1_ref[...], 0.0)

    # fc2: cast the activation to bf16 right at the dot operand only.
    logits = jnp.dot(h.astype(w2_ref.dtype), w2_ref[...],
                     preferred_element_type=jnp.float32) + b2_ref[...]

    # Numerically stable softmax over the lane-dense (128-wide) last axis; padded
    # lanes carry a -1e30 bias so exp() contributes exactly 0 there.  Exact division
    # keeps each row summing to 1 to f32 precision (downstream log-prob / sampling).
    m = jnp.max(logits, axis=-1, keepdims=True)
    e = jnp.exp(logits - m)
    denom = jnp.sum(e, axis=-1, keepdims=True)
    out_ref[...] = (e / denom).astype(out_ref.dtype)


def prepare_params(w1, b1, w2, b2):
    """One-time pad + bf16 cast of the weights (hoisted out of the per-step path).

    w1: [D_in, H] ; b1: [H] or [1, H] ; w2: [H, O] ; b2: [O] or [1, O]
    Returns padded params (bf16 weights, f32 biases) and the true output_dim.
    """
    d_in, H = w1.shape
    O = w2.shape[1]
    h_pad = _round_up(max(H, LANES), LANES)
    o_pad = _round_up(max(O, LANES), LANES)

    w1_p = jnp.pad(w1.astype(jnp.float32),
                   ((0, 0), (0, h_pad - H))).astype(jnp.bfloat16)        # K stays d_in
    b1_p = jnp.pad(b1.reshape(1, -1).astype(jnp.float32), ((0, 0), (0, h_pad - H)))
    w2_p = jnp.pad(w2.astype(jnp.float32),
                   ((0, h_pad - H), (0, o_pad - O))).astype(jnp.bfloat16)
    b2_p = jnp.pad(b2.reshape(1, -1).astype(jnp.float32), ((0, 0), (0, o_pad - O)),
                   constant_values=NEG_INF)
    return (w1_p, b1_p, w2_p, b2_p), O


def reinforce_forward(x, params, output_dim, *, tb=None):
    """Forward pass: policy probabilities [B, output_dim] in float32.

    x: [B, D_in] float32 (unpadded); params: output of prepare_params().
    tb=None -> single grid step over the whole batch (best on 1-TC v5e/v6e).
    """
    w1_p, b1_p, w2_p, b2_p = params
    B, d_in = x.shape
    assert w1_p.shape[0] == d_in
    h_pad = w1_p.shape[1]
    o_pad = w2_p.shape[1]

    if tb is None:
        tb = _round_up(max(B, 8), 8)          # one tile covering the whole batch
    b_pad = _round_up(B, tb)
    if b_pad != B:
        x = jnp.pad(x, ((0, b_pad - B), (0, 0)))   # batch pad only; features untouched

    grid = (b_pad // tb,)

    cost = pl.CostEstimate(
        flops=2 * b_pad * (d_in * h_pad + h_pad * o_pad),
        transcendentals=b_pad * o_pad,                      # exp in the softmax
        bytes_accessed=(x.size * 4 + w1_p.size * 2 + b1_p.size * 4
                        + w2_p.size * 2 + b2_p.size * 4 + b_pad * o_pad * 4),
    )

    out = pl.pallas_call(
        reinforce_forward_kernel,
        out_shape=jax.ShapeDtypeStruct((b_pad, o_pad), jnp.float32),
        grid_spec=pltpu.PrefetchScalarGridSpec(
            num_scalar_prefetch=0,
            grid=grid,
            in_specs=[
                pl.BlockSpec((tb, d_in), lambda i: (i, 0)),      # x: tiled over batch
                pl.BlockSpec((d_in, h_pad), lambda i: (0, 0)),   # w1: resident
                pl.BlockSpec((1, h_pad), lambda i: (0, 0)),      # b1: resident
                pl.BlockSpec((h_pad, o_pad), lambda i: (0, 0)),  # w2: resident
                pl.BlockSpec((1, o_pad), lambda i: (0, 0)),      # b2: resident
            ],
            out_specs=pl.BlockSpec((tb, o_pad), lambda i: (i, 0)),
        ),
        compiler_params=pltpu.CompilerParams(
            dimension_semantics=("parallel",),
        ),
        cost_estimate=cost,
    )(x, w1_p, b1_p, w2_p, b2_p)
    return out[:B, :output_dim]


def xavier_uniform(key, fan_in, fan_out):
    # nn.init.xavier_uniform_: U(-a, a), a = sqrt(6 / (fan_in + fan_out))
    bound = jnp.sqrt(6.0 / (fan_in + fan_out))
    return jax.random.uniform(key, (fan_in, fan_out), jnp.float32, -bound, bound)


def linear_bias_init(key, fan_in, fan_out):
    # PyTorch nn.Linear default bias init: U(-1/sqrt(fan_in), 1/sqrt(fan_in))
    bound = 1.0 / jnp.sqrt(jnp.float32(fan_in))
    return jax.random.uniform(key, (1, fan_out), jnp.float32, -bound, bound)


if __name__ == "__main__":
    # CliffWalking: 4x12 grid -> 48-dim one-hot state, 4 actions, hidden_dim=256
    # (module default).  Batch of 256 rollout states -> single-step grid, 256-row tile.
    batch, input_dim, hidden_dim, output_dim = 256, 48, 256, 4

    key = jax.random.PRNGKey(0)
    kx, kw1, kb1, kw2, kb2 = jax.random.split(key, 5)

    x = jax.random.normal(kx, (batch, input_dim), jnp.float32)
    w1 = xavier_uniform(kw1, input_dim, hidden_dim)
    b1 = linear_bias_init(kb1, input_dim, hidden_dim)
    w2 = xavier_uniform(kw2, hidden_dim, output_dim)
    b2 = linear_bias_init(kb2, hidden_dim, output_dim)

    # one-time weight pad/cast (per-step path touches only x + padded params)
    params, out_dim = prepare_params(w1, b1, w2, b2)

    policy = reinforce_forward(x, params, out_dim)
    policy = jax.block_until_ready(policy)
    assert policy.shape == (batch, output_dim)

    # precision-matched reference (same bf16 matmul operands, f32 accumulation)
    h_ref = jnp.maximum(
        jnp.dot(x.astype(jnp.bfloat16), w1.astype(jnp.bfloat16),
                preferred_element_type=jnp.float32) + b1, 0.0)
    logits_ref = jnp.dot(h_ref.astype(jnp.bfloat16), w2.astype(jnp.bfloat16),
                         preferred_element_type=jnp.float32) + b2
    ref = jax.nn.softmax(logits_ref, axis=-1)
    assert jnp.allclose(policy, ref, atol=2e-3, rtol=2e-3)

    # sanity vs the full-f32 forward (difference is just the bf16 matmul error)
    ref_f32 = jax.nn.softmax(jnp.maximum(x @ w1 + b1, 0.0) @ w2 + b2, axis=-1)
    assert jnp.allclose(policy, ref_f32, atol=3e-2)

    # rows are valid probability distributions (exact division in the kernel)
    assert jnp.allclose(jnp.sum(policy, axis=-1), 1.0, atol=1e-3)

    print("KERNEL_OK")
</pallas_src>

<mosaic_0001>
module attributes {stable_mosaic.version = 11 : i64} {
  func.func @reinforce_forward_kernel(%arg0: i32, %arg1: memref<256x48xf32, #tpu.memory_space<vmem>>, %arg2: memref<48x256xbf16, #tpu.memory_space<vmem>>, %arg3: memref<1x256xf32, #tpu.memory_space<vmem>>, %arg4: memref<256x128xbf16, #tpu.memory_space<vmem>>, %arg5: memref<1x128xf32, #tpu.memory_space<vmem>>, %arg6: memref<256x128xf32, #tpu.memory_space<vmem>>) attributes {dimension_semantics = [#tpu.dimension_semantics<parallel>], iteration_bounds = array<i64: 1>, scalar_prefetch = 0 : i64, scratch_operands = 0 : i64, tpu.core_type = #tpu.core_type<tc>, window_params = [{transform_indices = @transform_0, window_bounds = array<i64: 256, 48>}, {pipeline_mode = #tpu.pipeline_mode<synchronous>, transform_indices = @transform_1, window_bounds = array<i64: 48, 256>}, {pipeline_mode = #tpu.pipeline_mode<synchronous>, transform_indices = @transform_2, window_bounds = array<i64: 1, 256>}, {pipeline_mode = #tpu.pipeline_mode<synchronous>, transform_indices = @transform_3, window_bounds = array<i64: 256, 128>}, {pipeline_mode = #tpu.pipeline_mode<synchronous>, transform_indices = @transform_4, window_bounds = array<i64: 1, 128>}, {transform_indices = @transform_5, window_bounds = array<i64: 256, 128>}]} {
    %c0 = arith.constant 0 : index
    %c0_0 = arith.constant 0 : index
    %0 = vector.load %arg1[%c0, %c0_0] : memref<256x48xf32, #tpu.memory_space<vmem>>, vector<256x48xf32>
    %1 = arith.truncf %0 : vector<256x48xf32> to vector<256x48xbf16>
    %c0_1 = arith.constant 0 : index
    %c0_2 = arith.constant 0 : index
    %2 = vector.load %arg2[%c0_1, %c0_2] : memref<48x256xbf16, #tpu.memory_space<vmem>>, vector<48x256xbf16>
    %cst = arith.constant dense<0.000000e+00> : vector<256x256xf32>
    %3 = tpu.matmul %1, %2, %cst {dimension_numbers = #tpu.dot_dimension_numbers<[1], [0], [0], [1], [0, 0, 1, 1], [], []>} : vector<256x48xbf16>, vector<48x256xbf16>, vector<256x256xf32> -> vector<256x256xf32>
    %c0_3 = arith.constant 0 : index
    %c0_4 = arith.constant 0 : index
    %4 = vector.load %arg3[%c0_3, %c0_4] : memref<1x256xf32, #tpu.memory_space<vmem>>, vector<1x256xf32>
    %5 = vector.broadcast %4 : vector<1x256xf32> to vector<256x256xf32>
    %6 = arith.addf %3, %5 : vector<256x256xf32>
    %cst_5 = arith.constant 0.000000e+00 : f32
    %7 = vector.broadcast %cst_5 : f32 to vector<256x256xf32>
    %8 = arith.maximumf %6, %7 : vector<256x256xf32>
    %9 = arith.truncf %8 : vector<256x256xf32> to vector<256x256xbf16>
    %c0_6 = arith.constant 0 : index
    %c0_7 = arith.constant 0 : index
    %10 = vector.load %arg4[%c0_6, %c0_7] : memref<256x128xbf16, #tpu.memory_space<vmem>>, vector<256x128xbf16>
    %cst_8 = arith.constant dense<0.000000e+00> : vector<256x128xf32>
    %11 = tpu.matmul %9, %10, %cst_8 {dimension_numbers = #tpu.dot_dimension_numbers<[1], [0], [0], [1], [0, 0, 1, 1], [], []>} : vector<256x256xbf16>, vector<256x128xbf16>, vector<256x128xf32> -> vector<256x128xf32>
    %c0_9 = arith.constant 0 : index
    %c0_10 = arith.constant 0 : index
    %12 = vector.load %arg5[%c0_9, %c0_10] : memref<1x128xf32, #tpu.memory_space<vmem>>, vector<1x128xf32>
    %13 = vector.broadcast %12 : vector<1x128xf32> to vector<256x128xf32>
    %14 = arith.addf %11, %13 : vector<256x128xf32>
    %cst_11 = arith.constant dense<0xFF800000> : vector<256xf32>
    %15 = vector.multi_reduction <maximumf>, %14, %cst_11 [1] : vector<256x128xf32> to vector<256xf32>
    %16 = vector.shape_cast %15 : vector<256xf32> to vector<256x1xf32>
    %17 = vector.broadcast %16 : vector<256x1xf32> to vector<256x128xf32>
    %18 = arith.subf %14, %17 : vector<256x128xf32>
    %19 = math.exp %18 : vector<256x128xf32>
    %cst_12 = arith.constant dense<0.000000e+00> : vector<256xf32>
    %20 = vector.multi_reduction <add>, %19, %cst_12 [1] : vector<256x128xf32> to vector<256xf32>
    %21 = vector.shape_cast %20 : vector<256xf32> to vector<256x1xf32>
    %22 = vector.broadcast %21 : vector<256x1xf32> to vector<256x128xf32>
    %23 = arith.divf %19, %22 : vector<256x128xf32>
    %c0_13 = arith.constant 0 : index
    %c0_14 = arith.constant 0 : index
    %24 = vector.load %arg6[%c0_13, %c0_14] : memref<256x128xf32, #tpu.memory_space<vmem>>, vector<256x128xf32>
    tpu.vector_store %arg6[%c0_13, %c0_14], %23 {strides = array<i32>} : memref<256x128xf32, #tpu.memory_space<vmem>>, vector<256x128xf32>,
    return
  }
  func.func @transform_0(%arg0: i32) -> (i32, i32) {
    %c0_i32 = arith.constant 0 : i32
    %c0_i32_0 = arith.constant 0 : i32
    return %arg0, %c0_i32 : i32, i32
  }
  func.func @transform_1(%arg0: i32) -> (i32, i32) {
    %c0_i32 = arith.constant 0 : i32
    %c0_i32_0 = arith.constant 0 : i32
    %c0_i32_1 = arith.constant 0 : i32
    return %c0_i32, %c0_i32_0 : i32, i32
  }
  func.func @transform_2(%arg0: i32) -> (i32, i32) {
    %c0_i32 = arith.constant 0 : i32
    %c0_i32_0 = arith.constant 0 : i32
    %c0_i32_1 = arith.constant 0 : i32
    return %c0_i32, %c0_i32_0 : i32, i32
  }
  func.func @transform_3(%arg0: i32) -> (i32, i32) {
    %c0_i32 = arith.constant 0 : i32
    %c0_i32_0 = arith.constant 0 : i32
    %c0_i32_1 = arith.constant 0 : i32
    return %c0_i32, %c0_i32_0 : i32, i32
  }
  func.func @transform_4(%arg0: i32) -> (i32, i32) {
    %c0_i32 = arith.constant 0 : i32
    %c0_i32_0 = arith.constant 0 : i32
    %c0_i32_1 = arith.constant 0 : i32
    return %c0_i32, %c0_i32_0 : i32, i32
  }
  func.func @transform_5(%arg0: i32) -> (i32, i32) {
    %c0_i32 = arith.constant 0 : i32
    %c0_i32_0 = arith.constant 0 : i32
    return %arg0, %c0_i32 : i32, i32
  }
}

</mosaic_0001>

<llo_original>
// kernel: tpu_custom_call.1
$region0: #{tpu_custom_call.1}
  #allocation0 [shape = 'u32[]', space=smem, size = 0x4, offset = 0x4, fixed_abs, tag = 'smem constant byte address 0x4 - core index']
  #allocation1 [shape = 'u32[144,128]{1,0:T(1,128)}', space=vmem, size = 0x12000, scoped, tag = 'internal scratch']
  %s0 = inlined_call_operand.vmem [shape: f32[256,48], index: 0, kind: input, shape index: {}]
  %s1 = inlined_call_operand.vmem [shape: bf16[48,256], index: 1, kind: input, shape index: {}]
  %s2 = inlined_call_operand.vmem [shape: f32[1,256], index: 2, kind: input, shape index: {}]
  %s3 = inlined_call_operand.vmem [shape: bf16[256,128], index: 3, kind: input, shape index: {}]
  %s4 = inlined_call_operand.vmem [shape: f32[1,128], index: 4, kind: input, shape index: {}]
  %s5 = inlined_call_operand.hbm [shape: f32[256,128], index: 5, kind: output, shape index: {}]
  %s6 = sld [smem:[#allocation0]]
  $region30: #{tpu_custom_call.1} parent=0
    _
  %s8 = ssub.s32 1, %s6
  %s9 = scalar_select 0, %s8, %s6
  $region1: #{tpu_custom_call.1} parent=0
    #allocation2 [shape = 'u8[131072]{0}', space=vmem, size = 0x20000, scoped, tag = 'output window, operand 0, single buffered']
    #allocation3 [shape = 's32[1]{0}', space=sflag, size = 0x4, scoped, tag = 'scoped memory for tpu_custom_call.1']
    %10 = vsyncpa [#allocation3], 0
    // Predicated region
    $region2: #{tpu_custom_call.1} parent=1 // pred_check
      _
    $region3: #{tpu_custom_call.1} parent=1 // pred_check_branch
      %12 = sbr.rel (0) target = $region5
    $region4: #{tpu_custom_call.1} parent=1 // pred_region
      _
    $region5: #{tpu_custom_call.1} parent=1 // pred_fallthru
      _
    // Predicated region
    $region6: #{tpu_custom_call.1} parent=1 // pred_check
      _
    $region7: #{tpu_custom_call.1} parent=1 // pred_check_branch
      %14 = sbr.rel (0) target = $region9
    $region8: #{tpu_custom_call.1} parent=1 // pred_region
      _
    $region9: #{tpu_custom_call.1} parent=1 // pred_fallthru
      _
    // Predicated region
    $region10: #{tpu_custom_call.1} parent=1 // pred_check
      _
    $region11: #{tpu_custom_call.1} parent=1 // pred_check_branch
      %16 = sbr.rel (0) target = $region13
    $region12: #{tpu_custom_call.1} parent=1 // pred_region
      _
    $region13: #{tpu_custom_call.1} parent=1 // pred_fallthru
      _
    // Predicated region
    $region14: #{tpu_custom_call.1} parent=1 // pred_check
      _
    $region15: #{tpu_custom_call.1} parent=1 // pred_check_branch
      %18 = sbr.rel (0) target = $region17
    $region16: #{tpu_custom_call.1} parent=1 // pred_region
      _
    $region17: #{tpu_custom_call.1} parent=1 // pred_fallthru
      _
    // Predicated region
    $region18: #{tpu_custom_call.1} parent=1 // pred_check
      _
    $region19: #{tpu_custom_call.1} parent=1 // pred_check_branch
      %20 = sbr.rel (0) target = $region21
    $region20: #{tpu_custom_call.1} parent=1 // pred_region
      _
    $region21: #{tpu_custom_call.1} parent=1 // pred_fallthru
      _
    %v22 = vld [vmem:[%s0] sm:$0xff]
    %v23 = vld [vmem:[%s0 + $0x8] sm:$0xff]
    %v24 = vld [vmem:[%s0 + $0x10] sm:$0xff]
    %v25 = vld [vmem:[%s0 + $0x18] sm:$0xff]
    %v26 = vld [vmem:[%s0 + $0x20] sm:$0xff]
    %v27 = vld [vmem:[%s0 + $0x28] sm:$0xff]
    %v28 = vld [vmem:[%s0 + $0x30] sm:$0xff]
    %v29 = vld [vmem:[%s0 + $0x38] sm:$0xff]
    %v30 = vld [vmem:[%s0 + $0x40] sm:$0xff]
    %v31 = vld [vmem:[%s0 + $0x48] sm:$0xff]
    %v32 = vld [vmem:[%s0 + $0x50] sm:$0xff]
    %v33 = vld [vmem:[%s0 + $0x58] sm:$0xff]
    %v34 = vld [vmem:[%s0 + $0x60] sm:$0xff]
    %v35 = vld [vmem:[%s0 + $0x68] sm:$0xff]
    %v36 = vld [vmem:[%s0 + $0x70] sm:$0xff]
    %v37 = vld [vmem:[%s0 + $0x78] sm:$0xff]
    %v38 = vld [vmem:[%s0 + $0x80] sm:$0xff]
    %v39 = vld [vmem:[%s0 + $0x88] sm:$0xff]
    %v40 = vld [vmem:[%s0 + $0x90] sm:$0xff]
    %v41 = vld [vmem:[%s0 + $0x98] sm:$0xff]
    %v42 = vld [vmem:[%s0 + $0xa0] sm:$0xff]
    %v43 = vld [vmem:[%s0 + $0xa8] sm:$0xff]
    %v44 = vld [vmem:[%s0 + $0xb0] sm:$0xff]
    %v45 = vld [vmem:[%s0 + $0xb8] sm:$0xff]
    %v46 = vld [vmem:[%s0 + $0xc0] sm:$0xff]
    %v47 = vld [vmem:[%s0 + $0xc8] sm:$0xff]
    %v48 = vld [vmem:[%s0 + $0xd0] sm:$0xff]
    %v49 = vld [vmem:[%s0 + $0xd8] sm:$0xff]
    %v50 = vld [vmem:[%s0 + $0xe0] sm:$0xff]
    %v51 = vld [vmem:[%s0 + $0xe8] sm:$0xff]
    %v52 = vld [vmem:[%s0 + $0xf0] sm:$0xff]
    %v53 = vld [vmem:[%s0 + $0xf8] sm:$0xff]
    %v54 = vpack.c.bf16 %v23, %v22
    %v55 = vpack.c.bf16 %v25, %v24
    %v56 = vpack.c.bf16 %v27, %v26
    %v57 = vpack.c.bf16 %v29, %v28
    %v58 = vpack.c.bf16 %v31, %v30
    %v59 = vpack.c.bf16 %v33, %v32
    %v60 = vpack.c.bf16 %v35, %v34
    %v61 = vpack.c.bf16 %v37, %v36
    %v62 = vpack.c.bf16 %v39, %v38
    %v63 = vpack.c.bf16 %v41, %v40
    %v64 = vpack.c.bf16 %v43, %v42
    %v65 = vpack.c.bf16 %v45, %v44
    %v66 = vpack.c.bf16 %v47, %v46
    %v67 = vpack.c.bf16 %v49, %v48
    %v68 = vpack.c.bf16 %v51, %v50
    %v69 = vpack.c.bf16 %v53, %v52
    %v70 = vld [vmem:[%s1] sm:$0xff]
    %v71 = vld [vmem:[%s1 + $0x8] sm:$0xff]
    %v72 = vld [vmem:[%s1 + $0x10] sm:$0xff]
    %v73 = vld [vmem:[%s1 + $0x18] sm:$0xff]
    %v74 = vld [vmem:[%s1 + $0x20] sm:$0xff]
    %v75 = vld [vmem:[%s1 + $0x28] sm:$0xff]
    %v76 = vld [vmem:[%s2] sm:$0x3]
    %v78 = vlaneseq
    %v79 = vshrl.u32 %v78, 7
    %v80 = vsub.s32 0, %v79
    %v81 = vrot.slane %v76, %v80
    %v82 = vlaneseq
    %v83 = vshrl.u32 %v82, 7
    %v84 = vsub.s32 1, %v83
    %v85 = vrot.slane %v76, %v84
    %v94 = vunpack.c.l.b16 %v70
    %v95 = vunpack.c.h.b16 %v70
    %v96 = vunpack.c.l.b16 %v71
    %v97 = vunpack.c.h.b16 %v71
    %v98 = vunpack.c.l.b16 %v72
    %v99 = vunpack.c.h.b16 %v72
    %v100 = vunpack.c.l.b16 %v73
    %v101 = vunpack.c.h.b16 %v73
    %v102 = vunpack.c.l.b16 %v74
    %v103 = vunpack.c.h.b16 %v74
    %v104 = vunpack.c.l.b16 %v75
    %v105 = vunpack.c.h.b16 %v75
    %v106 = vpack.c.b16 %v96, %v94
    %v107 = vpack.c.b16 %v97, %v95
    %v108 = vpack.c.b16 %v100, %v98
    %v109 = vpack.c.b16 %v101, %v99
    %v110 = vpack.c.b16 %v104, %v102
    %v111 = vpack.c.b16 %v105, %v103
    %vm118 = vcmask 392192
    %v120 = vsel %vm118, %v54, 0
    %v123 = vsel %vm118, %v55, 0
    %v126 = vsel %vm118, %v56, 0
    %v129 = vsel %vm118, %v57, 0
    %v132 = vsel %vm118, %v58, 0
    %v135 = vsel %vm118, %v59, 0
    %v138 = vsel %vm118, %v60, 0
    %v141 = vsel %vm118, %v61, 0
    %v144 = vsel %vm118, %v62, 0
    %v147 = vsel %vm118, %v63, 0
    %v150 = vsel %vm118, %v64, 0
    %v153 = vsel %vm118, %v65, 0
    %v156 = vsel %vm118, %v66, 0
    %v159 = vsel %vm118, %v67, 0
    %v162 = vsel %vm118, %v68, 0
    %v165 = vsel %vm118, %v69, 0
    %167 = vmatprep.subr.bf16.mxu0 0
    %168 = vmatpush1.bf16.msra.mxu0 0
    %169 = vmatprep.subr.bf16.mxu0 0
    %170 = vmatpush1.bf16.msra.mxu0 0
    %171 = vmatprep.subr.bf16.mxu0 0
    %172 = vmatpush1.bf16.msra.mxu0 0
    %173 = vmatprep.subr.bf16.mxu0 0
    %174 = vmatpush1.bf16.msra.mxu0 0
    %175 = vmatprep.subr.bf16.mxu0 0
    %176 = vmatpush1.bf16.msra.mxu0 0
    %177 = vmatprep.subr.bf16.mxu0 %v111
    %178 = vmatpush1.bf16.msra.mxu0 %v110
    %179 = vmatprep.subr.bf16.mxu0 %v109
    %180 = vmatpush1.bf16.msra.mxu0 %v108
    %181 = vmatprep.subr.bf16.mxu0 %v107
    %182 = vmatpush1.bf16.msra.mxu0 %v106
    %183 = vmatprep.subr.bf16.mxu0 0
    %184 = vmatpush2.bf16.msra.mxu0 0
    %185 = vmatprep.subr.bf16.mxu0 0
    %186 = vmatpush2.bf16.msra.mxu0 0
    %187 = vmatprep.subr.bf16.mxu0 0
    %188 = vmatpush2.bf16.msra.mxu0 0
    %189 = vmatprep.subr.bf16.mxu0 0
    %190 = vmatpush2.bf16.msra.mxu0 0
    %191 = vmatprep.subr.bf16.mxu0 0
    %192 = vmatpush2.bf16.msra.mxu0 0
    %193 = vmatprep.subr.bf16.mxu0 0
    %194 = vmatpush2.bf16.msra.mxu0 0
    %195 = vmatprep.subr.bf16.mxu0 0
    %196 = vmatpush2.bf16.msra.mxu0 0
    %197 = vmatprep.subr.bf16.mxu0 0
    %198 = vmatpush2.bf16.msra.mxu0 0
    %199 = vmatprep.mubr.bf16.mxu0 0
    %200 = vmatmul.mubr.bf16.gmra.mxu0 %v120
    %v201 = vpop.f32.mrf.mxu0
    %v202 = vadd.f32 %v81, %v201
    %v203 = vpop.f32.mrf.mxu0
    %v204 = vadd.f32 %v85, %v203
    %v205 = vpop.f32.mrf.mxu0
    %v206 = vadd.f32 %v81, %v205
    %v207 = vpop.f32.mrf.mxu0
    %v208 = vadd.f32 %v85, %v207
    %209 = vmatprep.mubr.bf16.mxu0 0
    %210 = vmatmul.mubr.bf16.gmra.mxu0 %v123
    %v211 = vpop.f32.mrf.mxu0
    %v212 = vadd.f32 %v81, %v211
    %v213 = vpop.f32.mrf.mxu0
    %v214 = vadd.f32 %v85, %v213
    %v215 = vpop.f32.mrf.mxu0
    %v216 = vadd.f32 %v81, %v215
    %v217 = vpop.f32.mrf.mxu0
    %v218 = vadd.f32 %v85, %v217
    %219 = vmatprep.mubr.bf16.mxu0 0
    %220 = vmatmul.mubr.bf16.gmra.mxu0 %v126
    %v221 = vpop.f32.mrf.mxu0
    %v222 = vadd.f32 %v81, %v221
    %v223 = vpop.f32.mrf.mxu0
    %v224 = vadd.f32 %v85, %v223
    %v225 = vpop.f32.mrf.mxu0
    %v226 = vadd.f32 %v81, %v225
    %v227 = vpop.f32.mrf.mxu0
    %v228 = vadd.f32 %v85, %v227
    %229 = vmatprep.mubr.bf16.mxu0 0
    %230 = vmatmul.mubr.bf16.gmra.mxu0 %v129
    %v231 = vpop.f32.mrf.mxu0
    %v232 = vadd.f32 %v81, %v231
    %v233 = vpop.f32.mrf.mxu0
    %v234 = vadd.f32 %v85, %v233
    %v235 = vpop.f32.mrf.mxu0
    %v236 = vadd.f32 %v81, %v235
    %v237 = vpop.f32.mrf.mxu0
    %v238 = vadd.f32 %v85, %v237
    %239 = vmatprep.mubr.bf16.mxu0 0
    %240 = vmatmul.mubr.bf16.gmra.mxu0 %v132
    %v241 = vpop.f32.mrf.mxu0
    %v242 = vadd.f32 %v81, %v241
    %v243 = vpop.f32.mrf.mxu0
    %v244 = vadd.f32 %v85, %v243
    %v245 = vpop.f32.mrf.mxu0
    %v246 = vadd.f32 %v81, %v245
    %v247 = vpop.f32.mrf.mxu0
    %v248 = vadd.f32 %v85, %v247
    %249 = vmatprep.mubr.bf16.mxu0 0
    %250 = vmatmul.mubr.bf16.gmra.mxu0 %v135
    %v251 = vpop.f32.mrf.mxu0
    %v252 = vadd.f32 %v81, %v251
    %v253 = vpop.f32.mrf.mxu0
    %v254 = vadd.f32 %v85, %v253
    %v255 = vpop.f32.mrf.mxu0
    %v256 = vadd.f32 %v81, %v255
    %v257 = vpop.f32.mrf.mxu0
    %v258 = vadd.f32 %v85, %v257
    %259 = vmatprep.mubr.bf16.mxu0 0
    %260 = vmatmul.mubr.bf16.gmra.mxu0 %v138
    %v261 = vpop.f32.mrf.mxu0
    %v262 = vadd.f32 %v81, %v261
    %v263 = vpop.f32.mrf.mxu0
    %v264 = vadd.f32 %v85, %v263
    %v265 = vpop.f32.mrf.mxu0
    %v266 = vadd.f32 %v81, %v265
    %v267 = vpop.f32.mrf.mxu0
    %v268 = vadd.f32 %v85, %v267
    %269 = vmatprep.mubr.bf16.mxu0 0
    %270 = vmatmul.mubr.bf16.gmra.mxu0 %v141
    %v271 = vpop.f32.mrf.mxu0
    %v272 = vadd.f32 %v81, %v271
    %v273 = vpop.f32.mrf.mxu0
    %v274 = vadd.f32 %v85, %v273
    %v275 = vpop.f32.mrf.mxu0
    %v276 = vadd.f32 %v81, %v275
    %v277 = vpop.f32.mrf.mxu0
    %v278 = vadd.f32 %v85, %v277
    %279 = vmatprep.mubr.bf16.mxu0 0
    %280 = vmatmul.mubr.bf16.gmra.mxu0 %v144
    %v281 = vpop.f32.mrf.mxu0
    %v282 = vadd.f32 %v81, %v281
    %v283 = vpop.f32.mrf.mxu0
    %v284 = vadd.f32 %v85, %v283
    %v285 = vpop.f32.mrf.mxu0
    %v286 = vadd.f32 %v81, %v285
    %v287 = vpop.f32.mrf.mxu0
    %v288 = vadd.f32 %v85, %v287
    %289 = vmatprep.mubr.bf16.mxu0 0
    %290 = vmatmul.mubr.bf16.gmra.mxu0 %v147
    %v291 = vpop.f32.mrf.mxu0
    %v292 = vadd.f32 %v81, %v291
    %v293 = vpop.f32.mrf.mxu0
    %v294 = vadd.f32 %v85, %v293
    %v295 = vpop.f32.mrf.mxu0
    %v296 = vadd.f32 %v81, %v295
    %v297 = vpop.f32.mrf.mxu0
    %v298 = vadd.f32 %v85, %v297
    %299 = vmatprep.mubr.bf16.mxu0 0
    %300 = vmatmul.mubr.bf16.gmra.mxu0 %v150
    %v301 = vpop.f32.mrf.mxu0
    %v302 = vadd.f32 %v81, %v301
    %v303 = vpop.f32.mrf.mxu0
    %v304 = vadd.f32 %v85, %v303
    %v305 = vpop.f32.mrf.mxu0
    %v306 = vadd.f32 %v81, %v305
    %v307 = vpop.f32.mrf.mxu0
    %v308 = vadd.f32 %v85, %v307
    %309 = vmatprep.mubr.bf16.mxu0 0
    %310 = vmatmul.mubr.bf16.gmra.mxu0 %v153
    %v311 = vpop.f32.mrf.mxu0
    %v312 = vadd.f32 %v81, %v311
    %v313 = vpop.f32.mrf.mxu0
    %v314 = vadd.f32 %v85, %v313
    %v315 = vpop.f32.mrf.mxu0
    %v316 = vadd.f32 %v81, %v315
    %v317 = vpop.f32.mrf.mxu0
    %v318 = vadd.f32 %v85, %v317
    %319 = vmatprep.mubr.bf16.mxu0 0
    %320 = vmatmul.mubr.bf16.gmra.mxu0 %v156
    %v321 = vpop.f32.mrf.mxu0
    %v322 = vadd.f32 %v81, %v321
    %v323 = vpop.f32.mrf.mxu0
    %v324 = vadd.f32 %v85, %v323
    %v325 = vpop.f32.mrf.mxu0
    %v326 = vadd.f32 %v81, %v325
    %v327 = vpop.f32.mrf.mxu0
    %v328 = vadd.f32 %v85, %v327
    %329 = vmatprep.mubr.bf16.mxu0 0
    %330 = vmatmul.mubr.bf16.gmra.mxu0 %v159
    %v331 = vpop.f32.mrf.mxu0
    %v332 = vadd.f32 %v81, %v331
    %v333 = vpop.f32.mrf.mxu0
    %v334 = vadd.f32 %v85, %v333
    %v335 = vpop.f32.mrf.mxu0
    %v336 = vadd.f32 %v81, %v335
    %v337 = vpop.f32.mrf.mxu0
    %v338 = vadd.f32 %v85, %v337
    %339 = vmatprep.mubr.bf16.mxu0 0
    %340 = vmatmul.mubr.bf16.gmra.mxu0 %v162
    %v341 = vpop.f32.mrf.mxu0
    %v342 = vadd.f32 %v81, %v341
    %v343 = vpop.f32.mrf.mxu0
    %v344 = vadd.f32 %v85, %v343
    %v345 = vpop.f32.mrf.mxu0
    %v346 = vadd.f32 %v81, %v345
    %v347 = vpop.f32.mrf.mxu0
    %v348 = vadd.f32 %v85, %v347
    %349 = vmatprep.mubr.bf16.mxu0 0
    %350 = vmatmul.mubr.bf16.gmra.mxu0 %v165
    %v351 = vpop.f32.mrf.mxu0
    %v352 = vadd.f32 %v81, %v351
    %v353 = vpop.f32.mrf.mxu0
    %v354 = vadd.f32 %v85, %v353
    %v355 = vpop.f32.mrf.mxu0
    %v356 = vadd.f32 %v81, %v355
    %v357 = vpop.f32.mrf.mxu0
    %v358 = vadd.f32 %v85, %v357
    %359 = vdwg.mxu0
    %v360 = vmax.f32 %v202, 0.0
    %v361 = vmax.f32 %v204, 0.0
    %v362 = vmax.f32 %v206, 0.0
    %v363 = vmax.f32 %v208, 0.0
    %v364 = vmax.f32 %v212, 0.0
    %v365 = vmax.f32 %v214, 0.0
    %v366 = vmax.f32 %v216, 0.0
    %v367 = vmax.f32 %v218, 0.0
    %v368 = vmax.f32 %v222, 0.0
    %v369 = vmax.f32 %v224, 0.0
    %v370 = vmax.f32 %v226, 0.0
    %v371 = vmax.f32 %v228, 0.0
    %v372 = vmax.f32 %v232, 0.0
    %v373 = vmax.f32 %v234, 0.0
    %v374 = vmax.f32 %v236, 0.0
    %v375 = vmax.f32 %v238, 0.0
    %v376 = vmax.f32 %v242, 0.0
    %v377 = vmax.f32 %v244, 0.0
    %v378 = vmax.f32 %v246, 0.0
    %v379 = vmax.f32 %v248, 0.0
    %v380 = vmax.f32 %v252, 0.0
    %v381 = vmax.f32 %v254, 0.0
    %v382 = vmax.f32 %v256, 0.0
    %v383 = vmax.f32 %v258, 0.0
    %v384 = vmax.f32 %v262, 0.0
    %v385 = vmax.f32 %v264, 0.0
    %v386 = vmax.f32 %v266, 0.0
    %v387 = vmax.f32 %v268, 0.0
    %v388 = vmax.f32 %v272, 0.0
    %v389 = vmax.f32 %v274, 0.0
    %v390 = vmax.f32 %v276, 0.0
    %v391 = vmax.f32 %v278, 0.0
    %v392 = vmax.f32 %v282, 0.0
    %v393 = vmax.f32 %v284, 0.0
    %v394 = vmax.f32 %v286, 0.0
    %v395 = vmax.f32 %v288, 0.0
    %v396 = vmax.f32 %v292, 0.0
    %v397 = vmax.f32 %v294, 0.0
    %v398 = vmax.f32 %v296, 0.0
    %v399 = vmax.f32 %v298, 0.0
    %v400 = vmax.f32 %v302, 0.0
    %v401 = vmax.f32 %v304, 0.0
    %v402 = vmax.f32 %v306, 0.0
    %v403 = vmax.f32 %v308, 0.0
    %v404 = vmax.f32 %v312, 0.0
    %v405 = vmax.f32 %v314, 0.0
    %v406 = vmax.f32 %v316, 0.0
    %v407 = vmax.f32 %v318, 0.0
    %v408 = vmax.f32 %v322, 0.0
    %v409 = vmax.f32 %v324, 0.0
    %v410 = vmax.f32 %v326, 0.0
    %v411 = vmax.f32 %v328, 0.0
    %v412 = vmax.f32 %v332, 0.0
    %v413 = vmax.f32 %v334, 0.0
    %v414 = vmax.f32 %v336, 0.0
    %v415 = vmax.f32 %v338, 0.0
    %v416 = vmax.f32 %v342, 0.0
    %v417 = vmax.f32 %v344, 0.0
    %v418 = vmax.f32 %v346, 0.0
    %v419 = vmax.f32 %v348, 0.0
    %v420 = vmax.f32 %v352, 0.0
    %v421 = vmax.f32 %v354, 0.0
    %v422 = vmax.f32 %v356, 0.0
    %v423 = vmax.f32 %v358, 0.0
    %v424 = vpack.c.bf16 %v362, %v360
    %v425 = vpack.c.bf16 %v363, %v361
    %v426 = vpack.c.bf16 %v366, %v364
    %v427 = vpack.c.bf16 %v367, %v365
    %v428 = vpack.c.bf16 %v370, %v368
    %v429 = vpack.c.bf16 %v371, %v369
    %v430 = vpack.c.bf16 %v374, %v372
    %v431 = vpack.c.bf16 %v375, %v373
    %v432 = vpack.c.bf16 %v378, %v376
    %v433 = vpack.c.bf16 %v379, %v377
    %v434 = vpack.c.bf16 %v382, %v380
    %v435 = vpack.c.bf16 %v383, %v381
    %v436 = vpack.c.bf16 %v386, %v384
    %v437 = vpack.c.bf16 %v387, %v385
    %v438 = vpack.c.bf16 %v390, %v388
    %v439 = vpack.c.bf16 %v391, %v389
    %v440 = vpack.c.bf16 %v394, %v392
    %v441 = vpack.c.bf16 %v395, %v393
    %v442 = vpack.c.bf16 %v398, %v396
    %v443 = vpack.c.bf16 %v399, %v397
    %v444 = vpack.c.bf16 %v402, %v400
    %v445 = vpack.c.bf16 %v403, %v401
    %v446 = vpack.c.bf16 %v406, %v404
    %v447 = vpack.c.bf16 %v407, %v405
    %v448 = vpack.c.bf16 %v410, %v408
    %v449 = vpack.c.bf16 %v411, %v409
    %v450 = vpack.c.bf16 %v414, %v412
    %v451 = vpack.c.bf16 %v415, %v413
    %v452 = vpack.c.bf16 %v418, %v416
    %v453 = vpack.c.bf16 %v419, %v417
    %v454 = vpack.c.bf16 %v422, %v420
    %v455 = vpack.c.bf16 %v423, %v421
    %v456 = vld [vmem:[%s3] sm:$0xf]
    %v457 = vld [vmem:[%s3 + $0x4] sm:$0xf]
    %v458 = vld [vmem:[%s3 + $0x8] sm:$0xf]
    %v459 = vld [vmem:[%s3 + $0xc] sm:$0xf]
    %v460 = vld [vmem:[%s3 + $0x10] sm:$0xf]
    %v461 = vld [vmem:[%s3 + $0x14] sm:$0xf]
    %v462 = vld [vmem:[%s3 + $0x18] sm:$0xf]
    %v463 = vld [vmem:[%s3 + $0x1c] sm:$0xf]
    %v464 = vld [vmem:[%s3 + $0x20] sm:$0xf]
    %v465 = vld [vmem:[%s3 + $0x24] sm:$0xf]
    %v466 = vld [vmem:[%s3 + $0x28] sm:$0xf]
    %v467 = vld [vmem:[%s3 + $0x2c] sm:$0xf]
    %v468 = vld [vmem:[%s3 + $0x30] sm:$0xf]
    %v469 = vld [vmem:[%s3 + $0x34] sm:$0xf]
    %v470 = vld [vmem:[%s3 + $0x38] sm:$0xf]
    %v471 = vld [vmem:[%s3 + $0x3c] sm:$0xf]
    %v472 = vld [vmem:[%s3 + $0x40] sm:$0xf]
    %v473 = vld [vmem:[%s3 + $0x44] sm:$0xf]
    %v474 = vld [vmem:[%s3 + $0x48] sm:$0xf]
    %v475 = vld [vmem:[%s3 + $0x4c] sm:$0xf]
    %v476 = vld [vmem:[%s3 + $0x50] sm:$0xf]
    %v477 = vld [vmem:[%s3 + $0x54] sm:$0xf]
    %v478 = vld [vmem:[%s3 + $0x58] sm:$0xf]
    %v479 = vld [vmem:[%s3 + $0x5c] sm:$0xf]
    %v480 = vld [vmem:[%s3 + $0x60] sm:$0xf]
    %v481 = vld [vmem:[%s3 + $0x64] sm:$0xf]
    %v482 = vld [vmem:[%s3 + $0x68] sm:$0xf]
    %v483 = vld [vmem:[%s3 + $0x6c] sm:$0xf]
    %v484 = vld [vmem:[%s3 + $0x70] sm:$0xf]
    %v485 = vld [vmem:[%s3 + $0x74] sm:$0xf]
    %v486 = vld [vmem:[%s3 + $0x78] sm:$0xf]
    %v487 = vld [vmem:[%s3 + $0x7c] sm:$0xf]
    %v488 = vld [vmem:[%s4] sm:$0x1]
    %v490 = vlaneseq
    %v491 = vshrl.u32 %v490, 7
    %v492 = vsub.s32 0, %v491
    %v493 = vrot.slane %v488, %v492
    %v527 = vunpack.c.l.b16 %v456
    %v528 = vunpack.c.l.b16 %v457
    %v529 = vunpack.c.l.b16 %v458
    %v530 = vunpack.c.l.b16 %v459
    %v531 = vunpack.c.l.b16 %v460
    %v532 = vunpack.c.l.b16 %v461
    %v533 = vunpack.c.l.b16 %v462
    %v534 = vunpack.c.l.b16 %v463
    %v535 = vunpack.c.l.b16 %v464
    %v536 = vunpack.c.l.b16 %v465
    %v537 = vunpack.c.l.b16 %v466
    %v538 = vunpack.c.l.b16 %v467
    %v539 = vunpack.c.l.b16 %v468
    %v540 = vunpack.c.l.b16 %v469
    %v541 = vunpack.c.l.b16 %v470
    %v542 = vunpack.c.l.b16 %v471
    %v543 = vunpack.c.l.b16 %v472
    %v544 = vunpack.c.l.b16 %v473
    %v545 = vunpack.c.l.b16 %v474
    %v546 = vunpack.c.l.b16 %v475
    %v547 = vunpack.c.l.b16 %v476
    %v548 = vunpack.c.l.b16 %v477
    %v549 = vunpack.c.l.b16 %v478
    %v550 = vunpack.c.l.b16 %v479
    %v551 = vunpack.c.l.b16 %v480
    %v552 = vunpack.c.l.b16 %v481
    %v553 = vunpack.c.l.b16 %v482
    %v554 = vunpack.c.l.b16 %v483
    %v555 = vunpack.c.l.b16 %v484
    %v556 = vunpack.c.l.b16 %v485
    %v557 = vunpack.c.l.b16 %v486
    %v558 = vunpack.c.l.b16 %v487
    %v559 = vpack.c.b16 %v528, %v527
    %v560 = vpack.c.b16 %v530, %v529
    %v561 = vpack.c.b16 %v532, %v531
    %v562 = vpack.c.b16 %v534, %v533
    %v563 = vpack.c.b16 %v536, %v535
    %v564 = vpack.c.b16 %v538, %v537
    %v565 = vpack.c.b16 %v540, %v539
    %v566 = vpack.c.b16 %v542, %v541
    %v567 = vpack.c.b16 %v544, %v543
    %v568 = vpack.c.b16 %v546, %v545
    %v569 = vpack.c.b16 %v548, %v547
    %v570 = vpack.c.b16 %v550, %v549
    %v571 = vpack.c.b16 %v552, %v551
    %v572 = vpack.c.b16 %v554, %v553
    %v573 = vpack.c.b16 %v556, %v555
    %v574 = vpack.c.b16 %v558, %v557
    %591 = vmatprep.subr.bf16.mxu0 0
    %592 = vmatpush1.bf16.msra.mxu0 %v566
    %593 = vmatprep.subr.bf16.mxu0 0
    %594 = vmatpush1.bf16.msra.mxu0 %v565
    %595 = vmatprep.subr.bf16.mxu0 0
    %596 = vmatpush1.bf16.msra.mxu0 %v564
    %597 = vmatprep.subr.bf16.mxu0 0
    %598 = vmatpush1.bf16.msra.mxu0 %v563
    %599 = vmatprep.subr.bf16.mxu0 0
    %600 = vmatpush1.bf16.msra.mxu0 %v562
    %601 = vmatprep.subr.bf16.mxu0 0
    %602 = vmatpush1.bf16.msra.mxu0 %v561
    %603 = vmatprep.subr.bf16.mxu0 0
    %604 = vmatpush1.bf16.msra.mxu0 %v560
    %605 = vmatprep.subr.bf16.mxu0 0
    %606 = vmatpush1.bf16.msra.mxu0 %v559
    %607 = vmatprep.subr.bf16.mxu0 0
    %608 = vmatpush2.bf16.msra.mxu0 %v574
    %609 = vmatprep.subr.bf16.mxu0 0
    %610 = vmatpush2.bf16.msra.mxu0 %v573
    %611 = vmatprep.subr.bf16.mxu0 0
    %612 = vmatpush2.bf16.msra.mxu0 %v572
    %613 = vmatprep.subr.bf16.mxu0 0
    %614 = vmatpush2.bf16.msra.mxu0 %v571
    %615 = vmatprep.subr.bf16.mxu0 0
    %616 = vmatpush2.bf16.msra.mxu0 %v570
    %617 = vmatprep.subr.bf16.mxu0 0
    %618 = vmatpush2.bf16.msra.mxu0 %v569
    %619 = vmatprep.subr.bf16.mxu0 0
    %620 = vmatpush2.bf16.msra.mxu0 %v568
    %621 = vmatprep.subr.bf16.mxu0 0
    %622 = vmatpush2.bf16.msra.mxu0 %v567
    %623 = vmatprep.mubr.bf16.mxu0 %v425
    %624 = vmatmul.mubr.bf16.gmra.mxu0 %v424
    %v625 = vpop.f32.mrf.mxu0
    %v626 = vadd.f32 %v493, %v625
    %v627 = vpop.f32.mrf.mxu0
    %v628 = vpop.f32.mrf.mxu0
    %v629 = vadd.f32 %v493, %v628
    %v630 = vpop.f32.mrf.mxu0
    %631 = vmatprep.mubr.bf16.mxu0 %v427
    %632 = vmatmul.mubr.bf16.gmra.mxu0 %v426
    %v633 = vpop.f32.mrf.mxu0
    %v634 = vadd.f32 %v493, %v633
    %v635 = vpop.f32.mrf.mxu0
    %v636 = vpop.f32.mrf.mxu0
    %v637 = vadd.f32 %v493, %v636
    %v638 = vpop.f32.mrf.mxu0
    %639 = vmatprep.mubr.bf16.mxu0 %v429
    %640 = vmatmul.mubr.bf16.gmra.mxu0 %v428
    %v641 = vpop.f32.mrf.mxu0
    %v642 = vadd.f32 %v493, %v641
    %v643 = vpop.f32.mrf.mxu0
    %v644 = vpop.f32.mrf.mxu0
    %v645 = vadd.f32 %v493, %v644
    %v646 = vpop.f32.mrf.mxu0
    %647 = vmatprep.mubr.bf16.mxu0 %v431
    %648 = vmatmul.mubr.bf16.gmra.mxu0 %v430
    %v649 = vpop.f32.mrf.mxu0
    %v650 = vadd.f32 %v493, %v649
    %v651 = vpop.f32.mrf.mxu0
    %v652 = vpop.f32.mrf.mxu0
    %v653 = vadd.f32 %v493, %v652
    %v654 = vpop.f32.mrf.mxu0
    %655 = vmatprep.mubr.bf16.mxu0 %v433
    %656 = vmatmul.mubr.bf16.gmra.mxu0 %v432
    %v657 = vpop.f32.mrf.mxu0
    %v658 = vadd.f32 %v493, %v657
    %v659 = vpop.f32.mrf.mxu0
    %v660 = vpop.f32.mrf.mxu0
    %v661 = vadd.f32 %v493, %v660
    %v662 = vpop.f32.mrf.mxu0
    %663 = vmatprep.mubr.bf16.mxu0 %v435
    %664 = vmatmul.mubr.bf16.gmra.mxu0 %v434
    %v665 = vpop.f32.mrf.mxu0
    %v666 = vadd.f32 %v493, %v665
    %v667 = vpop.f32.mrf.mxu0
    %v668 = vpop.f32.mrf.mxu0
    %v669 = vadd.f32 %v493, %v668
    %v670 = vpop.f32.mrf.mxu0
    %671 = vmatprep.mubr.bf16.mxu0 %v437
    %672 = vmatmul.mubr.bf16.gmra.mxu0 %v436
    %v673 = vpop.f32.mrf.mxu0
    %v674 = vadd.f32 %v493, %v673
    %v675 = vpop.f32.mrf.mxu0
    %v676 = vpop.f32.mrf.mxu0
    %v677 = vadd.f32 %v493, %v676
    %v678 = vpop.f32.mrf.mxu0
    %679 = vmatprep.mubr.bf16.mxu0 %v439
    %680 = vmatmul.mubr.bf16.gmra.mxu0 %v438
    %v681 = vpop.f32.mrf.mxu0
    %v682 = vadd.f32 %v493, %v681
    %v683 = vpop.f32.mrf.mxu0
    %v684 = vpop.f32.mrf.mxu0
    %v685 = vadd.f32 %v493, %v684
    %v686 = vpop.f32.mrf.mxu0
    %687 = vmatprep.mubr.bf16.mxu0 %v441
    %688 = vmatmul.mubr.bf16.gmra.mxu0 %v440
    %v689 = vpop.f32.mrf.mxu0
    %v690 = vadd.f32 %v493, %v689
    %v691 = vpop.f32.mrf.mxu0
    %v692 = vpop.f32.mrf.mxu0
    %v693 = vadd.f32 %v493, %v692
    %v694 = vpop.f32.mrf.mxu0
    %695 = vmatprep.mubr.bf16.mxu0 %v443
    %696 = vmatmul.mubr.bf16.gmra.mxu0 %v442
    %v697 = vpop.f32.mrf.mxu0
    %v698 = vadd.f32 %v493, %v697
    %v699 = vpop.f32.mrf.mxu0
    %v700 = vpop.f32.mrf.mxu0
    %v701 = vadd.f32 %v493, %v700
    %v702 = vpop.f32.mrf.mxu0
    %703 = vmatprep.mubr.bf16.mxu0 %v445
    %704 = vmatmul.mubr.bf16.gmra.mxu0 %v444
    %v705 = vpop.f32.mrf.mxu0
    %v706 = vadd.f32 %v493, %v705
    %v707 = vpop.f32.mrf.mxu0
    %v708 = vpop.f32.mrf.mxu0
    %v709 = vadd.f32 %v493, %v708
    %v710 = vpop.f32.mrf.mxu0
    %711 = vmatprep.mubr.bf16.mxu0 %v447
    %712 = vmatmul.mubr.bf16.gmra.mxu0 %v446
    %v713 = vpop.f32.mrf.mxu0
    %v714 = vadd.f32 %v493, %v713
    %v715 = vpop.f32.mrf.mxu0
    %v716 = vpop.f32.mrf.mxu0
    %v717 = vadd.f32 %v493, %v716
    %v718 = vpop.f32.mrf.mxu0
    %719 = vmatprep.mubr.bf16.mxu0 %v449
    %720 = vmatmul.mubr.bf16.gmra.mxu0 %v448
    %v721 = vpop.f32.mrf.mxu0
    %v722 = vadd.f32 %v493, %v721
    %v723 = vpop.f32.mrf.mxu0
    %v724 = vpop.f32.mrf.mxu0
    %v725 = vadd.f32 %v493, %v724
    %v726 = vpop.f32.mrf.mxu0
    %727 = vmatprep.mubr.bf16.mxu0 %v451
    %728 = vmatmul.mubr.bf16.gmra.mxu0 %v450
    %v729 = vpop.f32.mrf.mxu0
    %v730 = vadd.f32 %v493, %v729
    %v731 = vpop.f32.mrf.mxu0
    %v732 = vpop.f32.mrf.mxu0
    %v733 = vadd.f32 %v493, %v732
    %v734 = vpop.f32.mrf.mxu0
    %735 = vmatprep.mubr.bf16.mxu0 %v453
    %736 = vmatmul.mubr.bf16.gmra.mxu0 %v452
    %v737 = vpop.f32.mrf.mxu0
    %v738 = vadd.f32 %v493, %v737
    %v739 = vpop.f32.mrf.mxu0
    %v740 = vpop.f32.mrf.mxu0
    %v741 = vadd.f32 %v493, %v740
    %v742 = vpop.f32.mrf.mxu0
    %743 = vmatprep.mubr.bf16.mxu0 %v455
    %744 = vmatmul.mubr.bf16.gmra.mxu0 %v454
    %v745 = vpop.f32.mrf.mxu0
    %v746 = vadd.f32 %v493, %v745
    %v747 = vpop.f32.mrf.mxu0
    %v748 = vpop.f32.mrf.mxu0
    %v749 = vadd.f32 %v493, %v748
    %v750 = vpop.f32.mrf.mxu0
    %751 = vdwg.mxu0
    %752 = vmax.xlane.f32.xlu0 %v626
    %v753 = vpop.xlane.xlu0 %752
    %754 = vmax.xlane.f32.xlu0 %v629
    %v755 = vpop.xlane.xlu0 %754
    %756 = vmax.xlane.f32.xlu0 %v634
    %v757 = vpop.xlane.xlu0 %756
    %758 = vmax.xlane.f32.xlu0 %v637
    %v759 = vpop.xlane.xlu0 %758
    %760 = vmax.xlane.f32.xlu0 %v642
    %v761 = vpop.xlane.xlu0 %760
    %762 = vmax.xlane.f32.xlu0 %v645
    %v763 = vpop.xlane.xlu0 %762
    %764 = vmax.xlane.f32.xlu0 %v650
    %v765 = vpop.xlane.xlu0 %764
    %766 = vmax.xlane.f32.xlu0 %v653
    %v767 = vpop.xlane.xlu0 %766
    %768 = vmax.xlane.f32.xlu0 %v658
    %v769 = vpop.xlane.xlu0 %768
    %770 = vmax.xlane.f32.xlu0 %v661
    %v771 = vpop.xlane.xlu0 %770
    %772 = vmax.xlane.f32.xlu0 %v666
    %v773 = vpop.xlane.xlu0 %772
    %774 = vmax.xlane.f32.xlu0 %v669
    %v775 = vpop.xlane.xlu0 %774
    %776 = vmax.xlane.f32.xlu0 %v674
    %v777 = vpop.xlane.xlu0 %776
    %778 = vmax.xlane.f32.xlu0 %v677
    %v779 = vpop.xlane.xlu0 %778
    %780 = vmax.xlane.f32.xlu0 %v682
    %v781 = vpop.xlane.xlu0 %780
    %782 = vmax.xlane.f32.xlu0 %v685
    %v783 = vpop.xlane.xlu0 %782
    %784 = vmax.xlane.f32.xlu0 %v690
    %v785 = vpop.xlane.xlu0 %784
    %786 = vmax.xlane.f32.xlu0 %v693
    %v787 = vpop.xlane.xlu0 %786
    %788 = vmax.xlane.f32.xlu0 %v698
    %v789 = vpop.xlane.xlu0 %788
    %790 = vmax.xlane.f32.xlu0 %v701
    %v791 = vpop.xlane.xlu0 %790
    %792 = vmax.xlane.f32.xlu0 %v706
    %v793 = vpop.xlane.xlu0 %792
    %794 = vmax.xlane.f32.xlu0 %v709
    %v795 = vpop.xlane.xlu0 %794
    %796 = vmax.xlane.f32.xlu0 %v714
    %v797 = vpop.xlane.xlu0 %796
    %798 = vmax.xlane.f32.xlu0 %v717
    %v799 = vpop.xlane.xlu0 %798
    %800 = vmax.xlane.f32.xlu0 %v722
    %v801 = vpop.xlane.xlu0 %800
    %802 = vmax.xlane.f32.xlu0 %v725
    %v803 = vpop.xlane.xlu0 %802
    %804 = vmax.xlane.f32.xlu0 %v730
    %v805 = vpop.xlane.xlu0 %804
    %806 = vmax.xlane.f32.xlu0 %v733
    %v807 = vpop.xlane.xlu0 %806
    %808 = vmax.xlane.f32.xlu0 %v738
    %v809 = vpop.xlane.xlu0 %808
    %810 = vmax.xlane.f32.xlu0 %v741
    %v811 = vpop.xlane.xlu0 %810
    %812 = vmax.xlane.f32.xlu0 %v746
    %v813 = vpop.xlane.xlu0 %812
    %814 = vmax.xlane.f32.xlu0 %v749
    %v815 = vpop.xlane.xlu0 %814
    %v816 = vsub.f32 %v626, %v753
    %v817 = vsub.f32 %v629, %v755
    %v818 = vsub.f32 %v634, %v757
    %v819 = vsub.f32 %v637, %v759
    %v820 = vsub.f32 %v642, %v761
    %v821 = vsub.f32 %v645, %v763
    %v822 = vsub.f32 %v650, %v765
    %v823 = vsub.f32 %v653, %v767
    %v824 = vsub.f32 %v658, %v769
    %v825 = vsub.f32 %v661, %v771
    %v826 = vsub.f32 %v666, %v773
    %v827 = vsub.f32 %v669, %v775
    %v828 = vsub.f32 %v674, %v777
    %v829 = vsub.f32 %v677, %v779
    %v830 = vsub.f32 %v682, %v781
    %v831 = vsub.f32 %v685, %v783
    %v832 = vsub.f32 %v690, %v785
    %v833 = vsub.f32 %v693, %v787
    %v834 = vsub.f32 %v698, %v789
    %v835 = vsub.f32 %v701, %v791
    %v836 = vsub.f32 %v706, %v793
    %v837 = vsub.f32 %v709, %v795
    %v838 = vsub.f32 %v714, %v797
    %v839 = vsub.f32 %v717, %v799
    %v840 = vsub.f32 %v722, %v801
    %v841 = vsub.f32 %v725, %v803
    %v842 = vsub.f32 %v730, %v805
    %v843 = vsub.f32 %v733, %v807
    %v844 = vsub.f32 %v738, %v809
    %v845 = vsub.f32 %v741, %v811
    %v846 = vsub.f32 %v746, %v813
    %v847 = vsub.f32 %v749, %v815
    %v848 = vmul.f32 %v816, 1.442695
    %v849 = vpow.pop %v848
    %v850 = vmul.f32 %v817, 1.442695
    %v851 = vpow.pop %v850
    %v852 = vmul.f32 %v818, 1.442695
    %v853 = vpow.pop %v852
    %v854 = vmul.f32 %v819, 1.442695
    %v855 = vpow.pop %v854
    %v856 = vmul.f32 %v820, 1.442695
    %v857 = vpow.pop %v856
    %v858 = vmul.f32 %v821, 1.442695
    %v859 = vpow.pop %v858
    %v860 = vmul.f32 %v822, 1.442695
    %v861 = vpow.pop %v860
    %v862 = vmul.f32 %v823, 1.442695
    %v863 = vpow.pop %v862
    %v864 = vmul.f32 %v824, 1.442695
    %v865 = vpow.pop %v864
    %v866 = vmul.f32 %v825, 1.442695
    %v867 = vpow.pop %v866
    %v868 = vmul.f32 %v826, 1.442695
    %v869 = vpow.pop %v868
    %v870 = vmul.f32 %v827, 1.442695
    %v871 = vpow.pop %v870
    %v872 = vmul.f32 %v828, 1.442695
    %v873 = vpow.pop %v872
    %v874 = vmul.f32 %v829, 1.442695
    %v875 = vpow.pop %v874
    %v876 = vmul.f32 %v830, 1.442695
    %v877 = vpow.pop %v876
    %v878 = vmul.f32 %v831, 1.442695
    %v879 = vpow.pop %v878
    %v880 = vmul.f32 %v832, 1.442695
    %v881 = vpow.pop %v880
    %v882 = vmul.f32 %v833, 1.442695
    %v883 = vpow.pop %v882
    %v884 = vmul.f32 %v834, 1.442695
    %v885 = vpow.pop %v884
    %v886 = vmul.f32 %v835, 1.442695
    %v887 = vpow.pop %v886
    %v888 = vmul.f32 %v836, 1.442695
    %v889 = vpow.pop %v888
    %v890 = vmul.f32 %v837, 1.442695
    %v891 = vpow.pop %v890
    %v892 = vmul.f32 %v838, 1.442695
    %v893 = vpow.pop %v892
    %v894 = vmul.f32 %v839, 1.442695
    %v895 = vpow.pop %v894
    %v896 = vmul.f32 %v840, 1.442695
    %v897 = vpow.pop %v896
    %v898 = vmul.f32 %v841, 1.442695
    %v899 = vpow.pop %v898
    %v900 = vmul.f32 %v842, 1.442695
    %v901 = vpow.pop %v900
    %v902 = vmul.f32 %v843, 1.442695
    %v903 = vpow.pop %v902
    %v904 = vmul.f32 %v844, 1.442695
    %v905 = vpow.pop %v904
    %v906 = vmul.f32 %v845, 1.442695
    %v907 = vpow.pop %v906
    %v908 = vmul.f32 %v846, 1.442695
    %v909 = vpow.pop %v908
    %v910 = vmul.f32 %v847, 1.442695
    %v911 = vpow.pop %v910
    %912 = vadd.xlane.f32.xlu0 %v849
    %v913 = vpop.xlane.xlu0 %912
    %914 = vadd.xlane.f32.xlu0 %v851
    %v915 = vpop.xlane.xlu0 %914
    %916 = vadd.xlane.f32.xlu0 %v853
    %v917 = vpop.xlane.xlu0 %916
    %918 = vadd.xlane.f32.xlu0 %v855
    %v919 = vpop.xlane.xlu0 %918
    %920 = vadd.xlane.f32.xlu0 %v857
    %v921 = vpop.xlane.xlu0 %920
    %922 = vadd.xlane.f32.xlu0 %v859
    %v923 = vpop.xlane.xlu0 %922
    %924 = vadd.xlane.f32.xlu0 %v861
    %v925 = vpop.xlane.xlu0 %924
    %926 = vadd.xlane.f32.xlu0 %v863
    %v927 = vpop.xlane.xlu0 %926
    %928 = vadd.xlane.f32.xlu0 %v865
    %v929 = vpop.xlane.xlu0 %928
    %930 = vadd.xlane.f32.xlu0 %v867
    %v931 = vpop.xlane.xlu0 %930
    %932 = vadd.xlane.f32.xlu0 %v869
    %v933 = vpop.xlane.xlu0 %932
    %934 = vadd.xlane.f32.xlu0 %v871
    %v935 = vpop.xlane.xlu0 %934
    %936 = vadd.xlane.f32.xlu0 %v873
    %v937 = vpop.xlane.xlu0 %936
    %938 = vadd.xlane.f32.xlu0 %v875
    %v939 = vpop.xlane.xlu0 %938
    %940 = vadd.xlane.f32.xlu0 %v877
    %v941 = vpop.xlane.xlu0 %940
    %942 = vadd.xlane.f32.xlu0 %v879
    %v943 = vpop.xlane.xlu0 %942
    %944 = vadd.xlane.f32.xlu0 %v881
    %v945 = vpop.xlane.xlu0 %944
    %946 = vadd.xlane.f32.xlu0 %v883
    %v947 = vpop.xlane.xlu0 %946
    %948 = vadd.xlane.f32.xlu0 %v885
    %v949 = vpop.xlane.xlu0 %948
    %950 = vadd.xlane.f32.xlu0 %v887
    %v951 = vpop.xlane.xlu0 %950
    %952 = vadd.xlane.f32.xlu0 %v889
    %v953 = vpop.xlane.xlu0 %952
    %954 = vadd.xlane.f32.xlu0 %v891
    %v955 = vpop.xlane.xlu0 %954
    %956 = vadd.xlane.f32.xlu0 %v893
    %v957 = vpop.xlane.xlu0 %956
    %958 = vadd.xlane.f32.xlu0 %v895
    %v959 = vpop.xlane.xlu0 %958
    %960 = vadd.xlane.f32.xlu0 %v897
    %v961 = vpop.xlane.xlu0 %960
    %962 = vadd.xlane.f32.xlu0 %v899
    %v963 = vpop.xlane.xlu0 %962
    %964 = vadd.xlane.f32.xlu0 %v901
    %v965 = vpop.xlane.xlu0 %964
    %966 = vadd.xlane.f32.xlu0 %v903
    %v967 = vpop.xlane.xlu0 %966
    %968 = vadd.xlane.f32.xlu0 %v905
    %v969 = vpop.xlane.xlu0 %968
    %970 = vadd.xlane.f32.xlu0 %v907
    %v971 = vpop.xlane.xlu0 %970
    %972 = vadd.xlane.f32.xlu0 %v909
    %v973 = vpop.xlane.xlu0 %972
    %974 = vadd.xlane.f32.xlu0 %v911
    %v975 = vpop.xlane.xlu0 %974
    %v976 = vrcp.pop %v913
    %v977 = vmul.f32 %v849, %v976
    %v978 = vrcp.pop %v915
    %v979 = vmul.f32 %v851, %v978
    %v980 = vrcp.pop %v917
    %v981 = vmul.f32 %v853, %v980
    %v982 = vrcp.pop %v919
    %v983 = vmul.f32 %v855, %v982
    %v984 = vrcp.pop %v921
    %v985 = vmul.f32 %v857, %v984
    %v986 = vrcp.pop %v923
    %v987 = vmul.f32 %v859, %v986
    %v988 = vrcp.pop %v925
    %v989 = vmul.f32 %v861, %v988
    %v990 = vrcp.pop %v927
    %v991 = vmul.f32 %v863, %v990
    %v992 = vrcp.pop %v929
    %v993 = vmul.f32 %v865, %v992
    %v994 = vrcp.pop %v931
    %v995 = vmul.f32 %v867, %v994
    %v996 = vrcp.pop %v933
    %v997 = vmul.f32 %v869, %v996
    %v998 = vrcp.pop %v935
    %v999 = vmul.f32 %v871, %v998
    %v1000 = vrcp.pop %v937
    %v1001 = vmul.f32 %v873, %v1000
    %v1002 = vrcp.pop %v939
    %v1003 = vmul.f32 %v875, %v1002
    %v1004 = vrcp.pop %v941
    %v1005 = vmul.f32 %v877, %v1004
    %v1006 = vrcp.pop %v943
    %v1007 = vmul.f32 %v879, %v1006
    %v1008 = vrcp.pop %v945
    %v1009 = vmul.f32 %v881, %v1008
    %v1010 = vrcp.pop %v947
    %v1011 = vmul.f32 %v883, %v1010
    %v1012 = vrcp.pop %v949
    %v1013 = vmul.f32 %v885, %v1012
    %v1014 = vrcp.pop %v951
    %v1015 = vmul.f32 %v887, %v1014
    %v1016 = vrcp.pop %v953
    %v1017 = vmul.f32 %v889, %v1016
    %v1018 = vrcp.pop %v955
    %v1019 = vmul.f32 %v891, %v1018
    %v1020 = vrcp.pop %v957
    %v1021 = vmul.f32 %v893, %v1020
    %v1022 = vrcp.pop %v959
    %v1023 = vmul.f32 %v895, %v1022
    %v1024 = vrcp.pop %v961
    %v1025 = vmul.f32 %v897, %v1024
    %v1026 = vrcp.pop %v963
    %v1027 = vmul.f32 %v899, %v1026
    %v1028 = vrcp.pop %v965
    %v1029 = vmul.f32 %v901, %v1028
    %v1030 = vrcp.pop %v967
    %v1031 = vmul.f32 %v903, %v1030
    %v1032 = vrcp.pop %v969
    %v1033 = vmul.f32 %v905, %v1032
    %v1034 = vrcp.pop %v971
    %v1035 = vmul.f32 %v907, %v1034
    %v1036 = vrcp.pop %v973
    %v1037 = vmul.f32 %v909, %v1036
    %v1038 = vrcp.pop %v975
    %v1039 = vmul.f32 %v911, %v1038
    %1040 = vst [vmem:[#allocation2] sm:$0xff] %v977
    %1041 = vst [vmem:[#allocation2 + $0x8] sm:$0xff] %v979
    %1042 = vst [vmem:[#allocation2 + $0x10] sm:$0xff] %v981
    %1043 = vst [vmem:[#allocation2 + $0x18] sm:$0xff] %v983
    %1044 = vst [vmem:[#allocation2 + $0x20] sm:$0xff] %v985
    %1045 = vst [vmem:[#allocation2 + $0x28] sm:$0xff] %v987
    %1046 = vst [vmem:[#allocation2 + $0x30] sm:$0xff] %v989
    %1047 = vst [vmem:[#allocation2 + $0x38] sm:$0xff] %v991
    %1048 = vst [vmem:[#allocation2 + $0x40] sm:$0xff] %v993
    %1049 = vst [vmem:[#allocation2 + $0x48] sm:$0xff] %v995
    %1050 = vst [vmem:[#allocation2 + $0x50] sm:$0xff] %v997
    %1051 = vst [vmem:[#allocation2 + $0x58] sm:$0xff] %v999
    %1052 = vst [vmem:[#allocation2 + $0x60] sm:$0xff] %v1001
    %1053 = vst [vmem:[#allocation2 + $0x68] sm:$0xff] %v1003
    %1054 = vst [vmem:[#allocation2 + $0x70] sm:$0xff] %v1005
    %1055 = vst [vmem:[#allocation2 + $0x78] sm:$0xff] %v1007
    %1056 = vst [vmem:[#allocation2 + $0x80] sm:$0xff] %v1009
    %1057 = vst [vmem:[#allocation2 + $0x88] sm:$0xff] %v1011
    %1058 = vst [vmem:[#allocation2 + $0x90] sm:$0xff] %v1013
    %1059 = vst [vmem:[#allocation2 + $0x98] sm:$0xff] %v1015
    %1060 = vst [vmem:[#allocation2 + $0xa0] sm:$0xff] %v1017
    %1061 = vst [vmem:[#allocation2 + $0xa8] sm:$0xff] %v1019
    %1062 = vst [vmem:[#allocation2 + $0xb0] sm:$0xff] %v1021
    %1063 = vst [vmem:[#allocation2 + $0xb8] sm:$0xff] %v1023
    %1064 = vst [vmem:[#allocation2 + $0xc0] sm:$0xff] %v1025
    %1065 = vst [vmem:[#allocation2 + $0xc8] sm:$0xff] %v1027
    %1066 = vst [vmem:[#allocation2 + $0xd0] sm:$0xff] %v1029
    %1067 = vst [vmem:[#allocation2 + $0xd8] sm:$0xff] %v1031
    %1068 = vst [vmem:[#allocation2 + $0xe0] sm:$0xff] %v1033
    %1069 = vst [vmem:[#allocation2 + $0xe8] sm:$0xff] %v1035
    %1070 = vst [vmem:[#allocation2 + $0xf0] sm:$0xff] %v1037
    %1071 = vst [vmem:[#allocation2 + $0xf8] sm:$0xff] %v1039
    // Predicated region
    $region22: #{tpu_custom_call.1} parent=1 // pred_check
      _
    $region23: #{tpu_custom_call.1} parent=1 // pred_check_branch
      %1073 = sbr.rel (0) target = $region25
    $region24: #{tpu_custom_call.1} parent=1 // pred_region
      %s1075 = ssub.s32 4096, 4096
      %1076 = vsyncadd [#allocation3], %s1075
      %s1077 = sshll.u32 [#allocation2], 4
      %s1078 = int_to_ptr.vmem [resolvable:$true] %s1077
      %1083 = dma.vmem_to_hbm [thread:$0]  %s1078, 4096, %s5, [#allocation3], 128, 128, 8
    $region25: #{tpu_custom_call.1} parent=1 // pred_fallthru
      _
    // Predicated region
    $region26: #{tpu_custom_call.1} parent=1 // pred_check
      _
    $region27: #{tpu_custom_call.1} parent=1 // pred_check_branch
      %1085 = sbr.rel (0) target = $region29
    $region28: #{tpu_custom_call.1} parent=1 // pred_region
      %1086 = dma.done [#allocation3], 4096
    $region29: #{tpu_custom_call.1} parent=1 // pred_fallthru
      _
    %1087 = vsyncpa [#allocation3], 1

</llo_original>
